<compile_context>
chip_gen: v7x
topology: tpu7x:2x2x1
jax: 0.10.0
libtpu: 0.0.40
codegen_flags: <defaults>
</compile_context>

<pallas_src>
import math

import jax
import jax.numpy as jnp
from jax.experimental import pallas as pl
from jax.experimental.pallas import tpu as pltpu


def _round_up(x, m):
    return ((x + m - 1) // m) * m


_MAX_TILE_ROWS = 1024  # default row tile: amortizes ~0.35us/grid-step, ~2 MiB VMEM


def _choose_tile_m(rows, sub, requested=None):
    """Row-tile selection.

    * Small inputs -> a single block equal to the (sublane-rounded) row count;
      a block dim equal to the full array dim is exempt from the (8,128) rule.
    * Large inputs -> a multiple of 128 (keeps the transposed (1, tile_m)
      output blocks lane-dense) with row-padding waste bounded to ~12.5%.
    """
    rows_s = _round_up(max(rows, 1), sub)
    cap = _round_up(max(int(requested), 1), 128) if requested else _MAX_TILE_ROWS
    if rows_s <= cap:
        return rows_s                     # single full block
    tile = cap
    while tile > 128 and (_round_up(rows, tile) - rows) * 8 > rows:
        tile //= 2                        # bound discarded padded-row work
    return tile


def _vmem_bytes(tile_m, hidden, hp, qp, x_itemsize, w_itemsize):
    """Conservative per-call VMEM footprint (double-buffering included)."""
    tile_l = _round_up(tile_m, 128)
    return (2 * tile_m * hidden * x_itemsize          # pipelined x blocks
            + 2 * 8 * tile_l * 4                      # pipelined (1, tile_m) out blocks
            + 2 * (hp * hidden + qp * hp) * w_itemsize  # resident weights
            + 3 * 2 * 128 * 128 * 4                   # lane-padded bias / w4 columns
            + (hp + qp) * tile_m * 4)                 # f32 intermediates h1^T, h3^T


def _symbolic_reasoning_kernel(x_ref, w1t_ref, b1_ref, w23t_ref, b23_ref,
                               w4_ref, b4_ref, o_ref):
    """Fused, transposed MLP for one row tile.

        h1^T  = relu(W1^T  @ x^T  + b1)   : (hp, tile_m)
        h3^T  = relu(W23^T @ h1^T + b23)  : (qp, tile_m)   W23 = W2 @ W3 (exact fold)
        out^T = sum_q(w4 * h3^T) + b4     : (1,  tile_m)   lane-dense store

    The first product contracts both operands on their minor axis (Q @ K^T
    pattern), so x stays in row-major layout, unpadded and untransposed.
    All matmuls accumulate in f32 on the MXU; x is cast to the weights'
    compute dtype in-kernel (free on the VPU).
    """
    cdt = w1t_ref.dtype
    x = x_ref[...]
    if x.dtype != cdt:
        x = x.astype(cdt)

    # (hp, H) contracted with (tile_m, H) on the last axes -> (hp, tile_m)
    h1t = jax.lax.dot_general(w1t_ref[...], x, (((1,), (1,)), ((), ())),
                              preferred_element_type=jnp.float32)
    h1t = jnp.maximum(h1t + b1_ref[...], 0.0)

    h3t = jnp.dot(w23t_ref[...], h1t.astype(cdt),
                  preferred_element_type=jnp.float32)
    h3t = jnp.maximum(h3t + b23_ref[...], 0.0)

    out_t = jnp.sum(h3t * w4_ref[...], axis=0, keepdims=True) + b4_ref[0]
    o_ref[...] = out_t.astype(o_ref.dtype)


def pack_params(params, compute_dtype=jnp.float32):
    """One-time parameter packing (hoisted out of the per-call hot path).

    Folds the two back-to-back Linears (no activation between them), stores
    weights transposed ([out, in]) and zero-padded on their *output* feature
    axes only, biases as f32 columns, b4 as a (1,) scalar for SMEM.
    """
    w1, b1, w2, b2, w3, b3, w4, b4 = params
    hidden = w1.shape[0]
    q = w3.shape[1]
    hp = _round_up(hidden, 128)
    qp = _round_up(q, 128)
    f32 = jnp.float32
    cdt = jnp.dtype(compute_dtype)

    w2f, w3f = w2.astype(f32), w3.astype(f32)
    w23 = w2f @ w3f                                    # (H, H//4)
    b23 = b2.astype(f32) @ w3f + b3.astype(f32)        # (H//4,)

    w1t = jnp.zeros((hp, hidden), cdt).at[:hidden, :].set(w1.astype(cdt).T)
    w23t = jnp.zeros((qp, hp), cdt).at[:q, :hidden].set(w23.astype(cdt).T)
    w4c = jnp.zeros((qp, 1), f32).at[:q, :].set(w4.astype(f32))
    b1c = jnp.zeros((hp, 1), f32).at[:hidden, 0].set(b1.astype(f32))
    b23c = jnp.zeros((qp, 1), f32).at[:q, 0].set(b23)
    b4s = b4.astype(f32).reshape(1)
    return (w1t, b1c, w23t, b23c, w4c, b4s)


def symbolic_reasoning_forward(x, packed, *, tile_m=None):
    """x: [..., hidden_size] -> [..., 1] (same dtype as x)."""
    w1t, b1c, w23t, b23c, w4c, b4s = packed
    hp, hidden = w1t.shape
    qp = w23t.shape[0]
    assert x.shape[-1] == hidden

    lead = x.shape[:-1]
    rows = int(math.prod(lead)) if lead else 1

    x_dt = jnp.dtype(x.dtype)
    sub = {4: 8, 2: 16, 1: 32}.get(x_dt.itemsize, 8)   # dtype-aware sublane rounding
    tm = _choose_tile_m(rows, sub, tile_m)
    rows_p = _round_up(rows, tm)

    x2d = x.reshape(rows, hidden)
    if rows_p != rows:
        x2d = jnp.pad(x2d, ((0, rows_p - rows), (0, 0)))  # row padding only

    w_dt = jnp.dtype(w1t.dtype)
    vmem_limit = int(min(32 * 1024 * 1024,
                         max(8 * 1024 * 1024,
                             2 * _vmem_bytes(tm, hidden, hp, qp,
                                             x_dt.itemsize, w_dt.itemsize))))

    cost = pl.CostEstimate(
        flops=int(2 * rows_p * (hidden * hp + hp * qp + qp)),
        transcendentals=0,
        bytes_accessed=int(rows_p * hidden * x_dt.itemsize
                           + rows_p * x_dt.itemsize
                           + (hp * hidden + qp * hp) * w_dt.itemsize
                           + (hp + 3 * qp + 1) * 4),
    )

    resident = lambda shape: pl.BlockSpec(shape, lambda i: (0, 0))

    out = pl.pallas_call(
        _symbolic_reasoning_kernel,
        out_shape=jax.ShapeDtypeStruct((1, rows_p), x.dtype),
        grid=(rows_p // tm,),
        in_specs=[
            pl.BlockSpec((tm, hidden), lambda i: (i, 0)),        # x (pipelined)
            resident((hp, hidden)),                              # W1^T
            resident((hp, 1)),                                   # b1
            resident((qp, hp)),                                  # W23^T
            resident((qp, 1)),                                   # b23
            resident((qp, 1)),                                   # w4 column
            pl.BlockSpec(memory_space=pltpu.MemorySpace.SMEM),   # b4 scalar
        ],
        out_specs=pl.BlockSpec((1, tm), lambda i: (0, i)),       # lane-dense out^T
        compiler_params=pltpu.CompilerParams(
            dimension_semantics=("parallel",),
            vmem_limit_bytes=vmem_limit),
        cost_estimate=cost,
    )(x2d, w1t, b1c, w23t, b23c, w4c, b4s)

    return out[0, :rows].reshape(*lead, 1)


def init_params(key, hidden_size):
    """Weights stored [in_features, out_features]; PyTorch-style uniform init."""
    h = hidden_size
    sizes = [(h, h), (h, h // 2), (h // 2, h // 4), (h // 4, 1)]
    params = []
    keys = jax.random.split(key, 2 * len(sizes))
    for i, (fan_in, fan_out) in enumerate(sizes):
        bound = 1.0 / (fan_in ** 0.5)
        w = jax.random.uniform(keys[2 * i], (fan_in, fan_out),
                               minval=-bound, maxval=bound, dtype=jnp.float32)
        b = jax.random.uniform(keys[2 * i + 1], (fan_out,),
                               minval=-bound, maxval=bound, dtype=jnp.float32)
        params += [w, b]
    return tuple(params)


def reference_forward(x, params):
    """Pure-JAX f32 reference of the *unfused* module (HIGHEST precision)."""
    w1, b1, w2, b2, w3, b3, w4, b4 = [p.astype(jnp.float32) for p in params]
    x = x.astype(jnp.float32)
    hi = jax.lax.Precision.HIGHEST
    h1 = jnp.maximum(jnp.dot(x, w1, precision=hi) + b1, 0.0)
    h2 = jnp.dot(h1, w2, precision=hi) + b2
    h3 = jnp.maximum(jnp.dot(h2, w3, precision=hi) + b3, 0.0)
    return jnp.dot(h3, w4, precision=hi) + b4


if __name__ == "__main__":
    hidden_size = 32
    batch, seq = 2, 8                      # x: [batch, seq, hidden_size]

    key = jax.random.PRNGKey(0)
    kx, kp = jax.random.split(key)
    x = jax.random.normal(kx, (batch, seq, hidden_size), dtype=jnp.float32)
    params = init_params(kp, hidden_size)
    ref = reference_forward(x, params)

    # f32 compute path (tolerance covers MXU f32 precision modes vs HIGHEST ref).
    packed_f32 = pack_params(params, compute_dtype=jnp.float32)
    out = jax.block_until_ready(symbolic_reasoning_forward(x, packed_f32))
    assert out.shape == (batch, seq, 1), out.shape
    assert jnp.allclose(out, ref, atol=1e-2, rtol=1e-2), \
        float(jnp.max(jnp.abs(out - ref)))

    # bf16 compute path: x stays f32 in HBM, cast to bf16 in-kernel; f32 MXU acc.
    packed_bf16 = pack_params(params, compute_dtype=jnp.bfloat16)
    out_bf = jax.block_until_ready(symbolic_reasoning_forward(x, packed_bf16))
    assert out_bf.shape == (batch, seq, 1), out_bf.shape
    assert jnp.allclose(out_bf.astype(jnp.float32), ref, atol=7e-2, rtol=7e-2), \
        float(jnp.max(jnp.abs(out_bf.astype(jnp.float32) - ref)))

    # Multi-tile grid path (rows > default tile) to exercise the pipelined grid
    # and the 128-multiple lane-dense output blocks.
    xl = jax.random.normal(jax.random.PRNGKey(1), (4, 320, hidden_size),
                           dtype=jnp.float32)
    refl = reference_forward(xl, params)
    outl = jax.block_until_ready(symbolic_reasoning_forward(xl, packed_f32))
    assert outl.shape == (4, 320, 1), outl.shape
    assert jnp.allclose(outl, refl, atol=1e-2, rtol=1e-2), \
        float(jnp.max(jnp.abs(outl - refl)))

    print("KERNEL_OK")
</pallas_src>

<mosaic_0001>
module attributes {stable_mosaic.version = 11 : i64} {
  func.func @_symbolic_reasoning_kernel(%arg0: i32, %arg1: memref<16x32xf32, #tpu.memory_space<vmem>>, %arg2: memref<128x32xf32, #tpu.memory_space<vmem>>, %arg3: memref<128x1xf32, #tpu.memory_space<vmem>>, %arg4: memref<128x128xf32, #tpu.memory_space<vmem>>, %arg5: memref<128x1xf32, #tpu.memory_space<vmem>>, %arg6: memref<128x1xf32, #tpu.memory_space<vmem>>, %arg7: memref<1xf32, #tpu.memory_space<smem>>, %arg8: memref<1x16xf32, #tpu.memory_space<vmem>>) attributes {dimension_semantics = [#tpu.dimension_semantics<parallel>], iteration_bounds = array<i64: 1>, scalar_prefetch = 0 : i64, scratch_operands = 0 : i64, tpu.core_type = #tpu.core_type<tc>, window_params = [{transform_indices = @transform_0, window_bounds = array<i64: 16, 32>}, {pipeline_mode = #tpu.pipeline_mode<synchronous>, transform_indices = @transform_1, window_bounds = array<i64: 128, 32>}, {pipeline_mode = #tpu.pipeline_mode<synchronous>, transform_indices = @transform_2, window_bounds = array<i64: 128, 1>}, {pipeline_mode = #tpu.pipeline_mode<synchronous>, transform_indices = @transform_3, window_bounds = array<i64: 128, 128>}, {pipeline_mode = #tpu.pipeline_mode<synchronous>, transform_indices = @transform_4, window_bounds = array<i64: 128, 1>}, {pipeline_mode = #tpu.pipeline_mode<synchronous>, transform_indices = @transform_5, window_bounds = array<i64: 128, 1>}, {transform_indices = @transform_6, window_bounds = array<i64: 1>}, {transform_indices = @transform_7, window_bounds = array<i64: 1, 16>}]} {
    %c0 = arith.constant 0 : index
    %c0_0 = arith.constant 0 : index
    %0 = vector.load %arg1[%c0, %c0_0] : memref<16x32xf32, #tpu.memory_space<vmem>>, vector<16x32xf32>
    %c0_1 = arith.constant 0 : index
    %c0_2 = arith.constant 0 : index
    %1 = vector.load %arg2[%c0_1, %c0_2] : memref<128x32xf32, #tpu.memory_space<vmem>>, vector<128x32xf32>
    %cst = arith.constant dense<0.000000e+00> : vector<128x16xf32>
    %2 = tpu.matmul %1, %0, %cst {dimension_numbers = #tpu.dot_dimension_numbers<[1], [1], [0], [0], [0, 0, 1, 0], [], []>} : vector<128x32xf32>, vector<16x32xf32>, vector<128x16xf32> -> vector<128x16xf32>
    %c0_3 = arith.constant 0 : index
    %c0_4 = arith.constant 0 : index
    %3 = vector.load %arg3[%c0_3, %c0_4] : memref<128x1xf32, #tpu.memory_space<vmem>>, vector<128x1xf32>
    %4 = vector.broadcast %3 : vector<128x1xf32> to vector<128x16xf32>
    %5 = arith.addf %2, %4 : vector<128x16xf32>
    %cst_5 = arith.constant 0.000000e+00 : f32
    %6 = vector.broadcast %cst_5 : f32 to vector<128x16xf32>
    %7 = arith.maximumf %5, %6 : vector<128x16xf32>
    %c0_6 = arith.constant 0 : index
    %c0_7 = arith.constant 0 : index
    %8 = vector.load %arg4[%c0_6, %c0_7] : memref<128x128xf32, #tpu.memory_space<vmem>>, vector<128x128xf32>
    %cst_8 = arith.constant dense<0.000000e+00> : vector<128x16xf32>
    %9 = tpu.matmul %8, %7, %cst_8 {dimension_numbers = #tpu.dot_dimension_numbers<[1], [0], [0], [1], [0, 0, 1, 1], [], []>} : vector<128x128xf32>, vector<128x16xf32>, vector<128x16xf32> -> vector<128x16xf32>
    %c0_9 = arith.constant 0 : index
    %c0_10 = arith.constant 0 : index
    %10 = vector.load %arg5[%c0_9, %c0_10] : memref<128x1xf32, #tpu.memory_space<vmem>>, vector<128x1xf32>
    %11 = vector.broadcast %10 : vector<128x1xf32> to vector<128x16xf32>
    %12 = arith.addf %9, %11 : vector<128x16xf32>
    %cst_11 = arith.constant 0.000000e+00 : f32
    %13 = vector.broadcast %cst_11 : f32 to vector<128x16xf32>
    %14 = arith.maximumf %12, %13 : vector<128x16xf32>
    %c0_12 = arith.constant 0 : index
    %c0_13 = arith.constant 0 : index
    %15 = vector.load %arg6[%c0_12, %c0_13] : memref<128x1xf32, #tpu.memory_space<vmem>>, vector<128x1xf32>
    %16 = vector.broadcast %15 : vector<128x1xf32> to vector<128x16xf32>
    %17 = arith.mulf %14, %16 : vector<128x16xf32>
    %cst_14 = arith.constant dense<0.000000e+00> : vector<16xf32>
    %18 = vector.multi_reduction <add>, %17, %cst_14 [0] : vector<128x16xf32> to vector<16xf32>
    %19 = vector.shape_cast %18 : vector<16xf32> to vector<1x16xf32>
    %c0_15 = arith.constant 0 : index
    %20 = memref.load %arg7[%c0_15] : memref<1xf32, #tpu.memory_space<smem>>
    %21 = vector.broadcast %20 : f32 to vector<1x16xf32>
    %22 = arith.addf %19, %21 : vector<1x16xf32>
    %c0_16 = arith.constant 0 : index
    %c0_17 = arith.constant 0 : index
    %23 = vector.load %arg8[%c0_16, %c0_17] : memref<1x16xf32, #tpu.memory_space<vmem>>, vector<1x16xf32>
    tpu.vector_store %arg8[%c0_16, %c0_17], %22 {strides = array<i32>} : memref<1x16xf32, #tpu.memory_space<vmem>>, vector<1x16xf32>,
    return
  }
  func.func @transform_0(%arg0: i32) -> (i32, i32) {
    %c0_i32 = arith.constant 0 : i32
    %c0_i32_0 = arith.constant 0 : i32
    return %arg0, %c0_i32 : i32, i32
  }
  func.func @transform_1(%arg0: i32) -> (i32, i32) {
    %c0_i32 = arith.constant 0 : i32
    %c0_i32_0 = arith.constant 0 : i32
    %c0_i32_1 = arith.constant 0 : i32
    return %c0_i32, %c0_i32_0 : i32, i32
  }
  func.func @transform_2(%arg0: i32) -> (i32, i32) {
    %c0_i32 = arith.constant 0 : i32
    %c0_i32_0 = arith.constant 0 : i32
    %c0_i32_1 = arith.constant 0 : i32
    return %c0_i32, %c0_i32_0 : i32, i32
  }
  func.func @transform_3(%arg0: i32) -> (i32, i32) {
    %c0_i32 = arith.constant 0 : i32
    %c0_i32_0 = arith.constant 0 : i32
    %c0_i32_1 = arith.constant 0 : i32
    return %c0_i32, %c0_i32_0 : i32, i32
  }
  func.func @transform_4(%arg0: i32) -> (i32, i32) {
    %c0_i32 = arith.constant 0 : i32
    %c0_i32_0 = arith.constant 0 : i32
    %c0_i32_1 = arith.constant 0 : i32
    return %c0_i32, %c0_i32_0 : i32, i32
  }
  func.func @transform_5(%arg0: i32) -> (i32, i32) {
    %c0_i32 = arith.constant 0 : i32
    %c0_i32_0 = arith.constant 0 : i32
    %c0_i32_1 = arith.constant 0 : i32
    return %c0_i32, %c0_i32_0 : i32, i32
  }
  func.func @transform_6(%arg0: i32) -> i32 {
    %c0_i32 = arith.constant 0 : i32
    %c0_i32_0 = arith.constant 0 : i32
    return %c0_i32 : i32
  }
  func.func @transform_7(%arg0: i32) -> (i32, i32) {
    %c0_i32 = arith.constant 0 : i32
    %c0_i32_0 = arith.constant 0 : i32
    return %c0_i32, %arg0 : i32, i32
  }
}

</mosaic_0001>

<llo_original>
// kernel: tpu_custom_call.1
$region0: #{tpu_custom_call.1}
  #allocation0 [shape = 'u32[]', space=smem, size = 0x4, offset = 0x4, fixed_abs, tag = 'smem constant byte address 0x4 - core index']
  #allocation1 [shape = 'u32[144,128]{1,0:T(1,128)}', space=vmem, size = 0x12000, scoped, tag = 'internal scratch']
  #allocation2 [shape = 'f32[1]{0:T(128)S(6)}', space=smem, size = 0x200, scoped, tag = 'scoped memory for tpu_custom_call.1']
  %s0 = inlined_call_operand.vmem [shape: f32[16,32], index: 0, kind: input, shape index: {}]
  %s1 = inlined_call_operand.vmem [shape: f32[128,32], index: 1, kind: input, shape index: {}]
  %s2 = inlined_call_operand.vmem [shape: f32[128,1], index: 2, kind: input, shape index: {}]
  %s3 = inlined_call_operand.vmem [shape: f32[128,128], index: 3, kind: input, shape index: {}]
  %s4 = inlined_call_operand.vmem [shape: f32[128,1], index: 4, kind: input, shape index: {}]
  %s5 = inlined_call_operand.vmem [shape: f32[128,1], index: 5, kind: input, shape index: {}]
  %s6 = inlined_call_operand.<no memory space> [shape: f32[1], index: 6, kind: input, shape index: {}]
  %s7 = inlined_call_operand.hbm [shape: f32[1,16], index: 7, kind: output, shape index: {}]
  %s8 = sld [smem:[#allocation0]]
  $region38: #{tpu_custom_call.1} parent=0
    _
  %s10 = ssub.s32 1, %s8
  %s11 = scalar_select 0, %s10, %s8
  %12 = sst [smem:[#allocation2]] %s6
  $region1: #{tpu_custom_call.1} parent=0
    #allocation3 [shape = 'u8[512]{0}', space=vmem, size = 0x400, scoped, tag = 'output window, operand 0, single buffered']
    #allocation4 [shape = 's32[1]{0}', space=sflag, size = 0x4, scoped, tag = 'scoped memory for tpu_custom_call.1']
    %13 = vsyncpa [#allocation4], 0
    // Predicated region
    $region2: #{tpu_custom_call.1} parent=1 // pred_check
      _
    $region3: #{tpu_custom_call.1} parent=1 // pred_check_branch
      %15 = sbr.rel (0) target = $region5
    $region4: #{tpu_custom_call.1} parent=1 // pred_region
      _
    $region5: #{tpu_custom_call.1} parent=1 // pred_fallthru
      _
    // Predicated region
    $region6: #{tpu_custom_call.1} parent=1 // pred_check
      _
    $region7: #{tpu_custom_call.1} parent=1 // pred_check_branch
      %17 = sbr.rel (0) target = $region9
    $region8: #{tpu_custom_call.1} parent=1 // pred_region
      _
    $region9: #{tpu_custom_call.1} parent=1 // pred_fallthru
      _
    // Predicated region
    $region10: #{tpu_custom_call.1} parent=1 // pred_check
      _
    $region11: #{tpu_custom_call.1} parent=1 // pred_check_branch
      %19 = sbr.rel (0) target = $region13
    $region12: #{tpu_custom_call.1} parent=1 // pred_region
      _
    $region13: #{tpu_custom_call.1} parent=1 // pred_fallthru
      _
    // Predicated region
    $region14: #{tpu_custom_call.1} parent=1 // pred_check
      _
    $region15: #{tpu_custom_call.1} parent=1 // pred_check_branch
      %21 = sbr.rel (0) target = $region17
    $region16: #{tpu_custom_call.1} parent=1 // pred_region
      _
    $region17: #{tpu_custom_call.1} parent=1 // pred_fallthru
      _
    // Predicated region
    $region18: #{tpu_custom_call.1} parent=1 // pred_check
      _
    $region19: #{tpu_custom_call.1} parent=1 // pred_check_branch
      %23 = sbr.rel (0) target = $region21
    $region20: #{tpu_custom_call.1} parent=1 // pred_region
      _
    $region21: #{tpu_custom_call.1} parent=1 // pred_fallthru
      _
    // Predicated region
    $region22: #{tpu_custom_call.1} parent=1 // pred_check
      _
    $region23: #{tpu_custom_call.1} parent=1 // pred_check_branch
      %25 = sbr.rel (0) target = $region25
    $region24: #{tpu_custom_call.1} parent=1 // pred_region
      _
    $region25: #{tpu_custom_call.1} parent=1 // pred_fallthru
      _
    // Predicated region
    $region26: #{tpu_custom_call.1} parent=1 // pred_check
      _
    $region27: #{tpu_custom_call.1} parent=1 // pred_check_branch
      %27 = sbr.rel (0) target = $region29
    $region28: #{tpu_custom_call.1} parent=1 // pred_region
      _
    $region29: #{tpu_custom_call.1} parent=1 // pred_fallthru
      _
    %v28 = vld [vmem:[%s0] sm:$0xff]
    %v29 = vld [vmem:[%s0 + $0x8] sm:$0xff]
    %v30 = vld [vmem:[%s1] sm:$0xff]
    %v31 = vld [vmem:[%s1 + $0x8] sm:$0xff]
    %v32 = vld [vmem:[%s1 + $0x10] sm:$0xff]
    %v33 = vld [vmem:[%s1 + $0x18] sm:$0xff]
    %v34 = vld [vmem:[%s1 + $0x20] sm:$0xff]
    %v35 = vld [vmem:[%s1 + $0x28] sm:$0xff]
    %v36 = vld [vmem:[%s1 + $0x30] sm:$0xff]
    %v37 = vld [vmem:[%s1 + $0x38] sm:$0xff]
    %v38 = vld [vmem:[%s1 + $0x40] sm:$0xff]
    %v39 = vld [vmem:[%s1 + $0x48] sm:$0xff]
    %v40 = vld [vmem:[%s1 + $0x50] sm:$0xff]
    %v41 = vld [vmem:[%s1 + $0x58] sm:$0xff]
    %v42 = vld [vmem:[%s1 + $0x60] sm:$0xff]
    %v43 = vld [vmem:[%s1 + $0x68] sm:$0xff]
    %v44 = vld [vmem:[%s1 + $0x70] sm:$0xff]
    %v45 = vld [vmem:[%s1 + $0x78] sm:$0xff]
    %v46 = vld [vmem:[%s2] sm:$0xff]
    %v47 = vld [vmem:[%s2 + $0x8] sm:$0xff]
    %v48 = vld [vmem:[%s2 + $0x10] sm:$0xff]
    %v49 = vld [vmem:[%s2 + $0x18] sm:$0xff]
    %v50 = vld [vmem:[%s2 + $0x20] sm:$0xff]
    %v51 = vld [vmem:[%s2 + $0x28] sm:$0xff]
    %v52 = vld [vmem:[%s2 + $0x30] sm:$0xff]
    %v53 = vld [vmem:[%s2 + $0x38] sm:$0xff]
    %v54 = vld [vmem:[%s2 + $0x40] sm:$0xff]
    %v55 = vld [vmem:[%s2 + $0x48] sm:$0xff]
    %v56 = vld [vmem:[%s2 + $0x50] sm:$0xff]
    %v57 = vld [vmem:[%s2 + $0x58] sm:$0xff]
    %v58 = vld [vmem:[%s2 + $0x60] sm:$0xff]
    %v59 = vld [vmem:[%s2 + $0x68] sm:$0xff]
    %v60 = vld [vmem:[%s2 + $0x70] sm:$0xff]
    %v61 = vld [vmem:[%s2 + $0x78] sm:$0xff]
    %63 = vset.pattern.permute.xlu0 0
    %64 = vperm.xlu0 %63, %v46
    %v65 = vpop.permute.xlu0 %64
    %68 = vset.pattern.permute.xlu0 0
    %69 = vperm.xlu0 %68, %v47
    %v70 = vpop.permute.xlu0 %69
    %73 = vset.pattern.permute.xlu0 0
    %74 = vperm.xlu0 %73, %v48
    %v75 = vpop.permute.xlu0 %74
    %78 = vset.pattern.permute.xlu0 0
    %79 = vperm.xlu0 %78, %v49
    %v80 = vpop.permute.xlu0 %79
    %83 = vset.pattern.permute.xlu0 0
    %84 = vperm.xlu0 %83, %v50
    %v85 = vpop.permute.xlu0 %84
    %88 = vset.pattern.permute.xlu0 0
    %89 = vperm.xlu0 %88, %v51
    %v90 = vpop.permute.xlu0 %89
    %93 = vset.pattern.permute.xlu0 0
    %94 = vperm.xlu0 %93, %v52
    %v95 = vpop.permute.xlu0 %94
    %98 = vset.pattern.permute.xlu0 0
    %99 = vperm.xlu0 %98, %v53
    %v100 = vpop.permute.xlu0 %99
    %103 = vset.pattern.permute.xlu0 0
    %104 = vperm.xlu0 %103, %v54
    %v105 = vpop.permute.xlu0 %104
    %108 = vset.pattern.permute.xlu0 0
    %109 = vperm.xlu0 %108, %v55
    %v110 = vpop.permute.xlu0 %109
    %113 = vset.pattern.permute.xlu0 0
    %114 = vperm.xlu0 %113, %v56
    %v115 = vpop.permute.xlu0 %114
    %118 = vset.pattern.permute.xlu0 0
    %119 = vperm.xlu0 %118, %v57
    %v120 = vpop.permute.xlu0 %119
    %123 = vset.pattern.permute.xlu0 0
    %124 = vperm.xlu0 %123, %v58
    %v125 = vpop.permute.xlu0 %124
    %128 = vset.pattern.permute.xlu0 0
    %129 = vperm.xlu0 %128, %v59
    %v130 = vpop.permute.xlu0 %129
    %133 = vset.pattern.permute.xlu0 0
    %134 = vperm.xlu0 %133, %v60
    %v135 = vpop.permute.xlu0 %134
    %138 = vset.pattern.permute.xlu0 0
    %139 = vperm.xlu0 %138, %v61
    %v140 = vpop.permute.xlu0 %139
    %vm142 = vcmask 261120
    %v144 = vsel %vm142, %v30, 0
    %v147 = vsel %vm142, %v31, 0
    %v150 = vsel %vm142, %v32, 0
    %v153 = vsel %vm142, %v33, 0
    %v156 = vsel %vm142, %v34, 0
    %v159 = vsel %vm142, %v35, 0
    %v162 = vsel %vm142, %v36, 0
    %v165 = vsel %vm142, %v37, 0
    %v168 = vsel %vm142, %v38, 0
    %v171 = vsel %vm142, %v39, 0
    %v174 = vsel %vm142, %v40, 0
    %v177 = vsel %vm142, %v41, 0
    %v180 = vsel %vm142, %v42, 0
    %v183 = vsel %vm142, %v43, 0
    %v186 = vsel %vm142, %v44, 0
    %v189 = vsel %vm142, %v45, 0
    %v192 = vsel %vm142, %v28, 0
    %v195 = vsel %vm142, %v29, 0
    %197 = vmatprep.subr.mxu0 0.0
    %198 = vmatpush1.xpose.msra.mxu0 %v192
    %199 = vmatprep.subr.mxu0 0.0
    %200 = vmatpush1.xpose.msra.mxu0 %v195
    %201 = vmatprep.subr.mxu0 0.0
    %202 = vmatpush1.xpose.msra.mxu0 0.0
    %203 = vmatprep.subr.mxu0 0.0
    %204 = vmatpush1.xpose.msra.mxu0 0.0
    %205 = vmatprep.subr.mxu0 0.0
    %206 = vmatpush1.xpose.msra.mxu0 0.0
    %207 = vmatprep.subr.mxu0 0.0
    %208 = vmatpush1.xpose.msra.mxu0 0.0
    %209 = vmatprep.subr.mxu0 0.0
    %210 = vmatpush1.xpose.msra.mxu0 0.0
    %211 = vmatprep.subr.mxu0 0.0
    %212 = vmatpush1.xpose.msra.mxu0 0.0
    %213 = vmatprep.subr.mxu0 0.0
    %214 = vmatpush1.xpose.msra.mxu0 0.0
    %215 = vmatprep.subr.mxu0 0.0
    %216 = vmatpush1.xpose.msra.mxu0 0.0
    %217 = vmatprep.subr.mxu0 0.0
    %218 = vmatpush1.xpose.msra.mxu0 0.0
    %219 = vmatprep.subr.mxu0 0.0
    %220 = vmatpush1.xpose.msra.mxu0 0.0
    %221 = vmatprep.subr.mxu0 0.0
    %222 = vmatpush1.xpose.msra.mxu0 0.0
    %223 = vmatprep.subr.mxu0 0.0
    %224 = vmatpush1.xpose.msra.mxu0 0.0
    %225 = vmatprep.subr.mxu0 0.0
    %226 = vmatpush1.xpose.msra.mxu0 0.0
    %227 = vmatprep.subr.mxu0 0.0
    %228 = vmatpush1.xpose.msra.mxu0 0.0
    %229 = vmatprep.subr.mxu0 0.0
    %230 = vmatpush1.xpose.msra.mxu0 0.0
    %231 = vmatprep.subr.mxu0 0.0
    %232 = vmatpush1.xpose.msra.mxu0 0.0
    %233 = vmatprep.subr.mxu0 0.0
    %234 = vmatpush1.xpose.msra.mxu0 0.0
    %235 = vmatprep.subr.mxu0 0.0
    %236 = vmatpush1.xpose.msra.mxu0 0.0
    %237 = vmatprep.subr.mxu0 0.0
    %238 = vmatpush1.xpose.msra.mxu0 0.0
    %239 = vmatprep.subr.mxu0 0.0
    %240 = vmatpush1.xpose.msra.mxu0 0.0
    %241 = vmatprep.subr.mxu0 0.0
    %242 = vmatpush1.xpose.msra.mxu0 0.0
    %243 = vmatprep.subr.mxu0 0.0
    %244 = vmatpush1.xpose.msra.mxu0 0.0
    %245 = vmatprep.subr.mxu0 0.0
    %246 = vmatpush1.xpose.msra.mxu0 0.0
    %247 = vmatprep.subr.mxu0 0.0
    %248 = vmatpush1.xpose.msra.mxu0 0.0
    %249 = vmatprep.subr.mxu0 0.0
    %250 = vmatpush1.xpose.msra.mxu0 0.0
    %251 = vmatprep.subr.mxu0 0.0
    %252 = vmatpush1.xpose.msra.mxu0 0.0
    %253 = vmatprep.subr.mxu0 0.0
    %254 = vmatpush1.xpose.msra.mxu0 0.0
    %255 = vmatprep.subr.mxu0 0.0
    %256 = vmatpush1.xpose.msra.mxu0 0.0
    %257 = vmatprep.subr.mxu0 0.0
    %258 = vmatpush1.xpose.msra.mxu0 0.0
    %259 = vmatprep.subr.mxu0 0.0
    %260 = vmatpush1.xpose.msra.mxu0 0.0
    %261 = vmatprep.mubr.f32.mxu0 0.0
    %262 = vmatmul.mubr.f32.gmra.mrb[0].mxu0 %v144
    %v263 = vpop.f32.mrb[0].mxu0
    %v264 = vadd.f32 %v65, %v263
    %v265 = vpop.f32.mrb[0].mxu0
    %266 = vmatprep.mubr.f32.mxu0 0.0
    %267 = vmatmul.mubr.f32.gmra.mrb[0].mxu0 %v147
    %v268 = vpop.f32.mrb[0].mxu0
    %v269 = vadd.f32 %v70, %v268
    %v270 = vpop.f32.mrb[0].mxu0
    %271 = vmatprep.mubr.f32.mxu0 0.0
    %272 = vmatmul.mubr.f32.gmra.mrb[0].mxu0 %v150
    %v273 = vpop.f32.mrb[0].mxu0
    %v274 = vadd.f32 %v75, %v273
    %v275 = vpop.f32.mrb[0].mxu0
    %276 = vmatprep.mubr.f32.mxu0 0.0
    %277 = vmatmul.mubr.f32.gmra.mrb[0].mxu0 %v153
    %v278 = vpop.f32.mrb[0].mxu0
    %v279 = vadd.f32 %v80, %v278
    %v280 = vpop.f32.mrb[0].mxu0
    %281 = vmatprep.mubr.f32.mxu0 0.0
    %282 = vmatmul.mubr.f32.gmra.mrb[0].mxu0 %v156
    %v283 = vpop.f32.mrb[0].mxu0
    %v284 = vadd.f32 %v85, %v283
    %v285 = vpop.f32.mrb[0].mxu0
    %286 = vmatprep.mubr.f32.mxu0 0.0
    %287 = vmatmul.mubr.f32.gmra.mrb[0].mxu0 %v159
    %v288 = vpop.f32.mrb[0].mxu0
    %v289 = vadd.f32 %v90, %v288
    %v290 = vpop.f32.mrb[0].mxu0
    %291 = vmatprep.mubr.f32.mxu0 0.0
    %292 = vmatmul.mubr.f32.gmra.mrb[0].mxu0 %v162
    %v293 = vpop.f32.mrb[0].mxu0
    %v294 = vadd.f32 %v95, %v293
    %v295 = vpop.f32.mrb[0].mxu0
    %296 = vmatprep.mubr.f32.mxu0 0.0
    %297 = vmatmul.mubr.f32.gmra.mrb[0].mxu0 %v165
    %v298 = vpop.f32.mrb[0].mxu0
    %v299 = vadd.f32 %v100, %v298
    %v300 = vpop.f32.mrb[0].mxu0
    %301 = vmatprep.mubr.f32.mxu0 0.0
    %302 = vmatmul.mubr.f32.gmra.mrb[0].mxu0 %v168
    %v303 = vpop.f32.mrb[0].mxu0
    %v304 = vadd.f32 %v105, %v303
    %v305 = vpop.f32.mrb[0].mxu0
    %306 = vmatprep.mubr.f32.mxu0 0.0
    %307 = vmatmul.mubr.f32.gmra.mrb[0].mxu0 %v171
    %v308 = vpop.f32.mrb[0].mxu0
    %v309 = vadd.f32 %v110, %v308
    %v310 = vpop.f32.mrb[0].mxu0
    %311 = vmatprep.mubr.f32.mxu0 0.0
    %312 = vmatmul.mubr.f32.gmra.mrb[0].mxu0 %v174
    %v313 = vpop.f32.mrb[0].mxu0
    %v314 = vadd.f32 %v115, %v313
    %v315 = vpop.f32.mrb[0].mxu0
    %316 = vmatprep.mubr.f32.mxu0 0.0
    %317 = vmatmul.mubr.f32.gmra.mrb[0].mxu0 %v177
    %v318 = vpop.f32.mrb[0].mxu0
    %v319 = vadd.f32 %v120, %v318
    %v320 = vpop.f32.mrb[0].mxu0
    %321 = vmatprep.mubr.f32.mxu0 0.0
    %322 = vmatmul.mubr.f32.gmra.mrb[0].mxu0 %v180
    %v323 = vpop.f32.mrb[0].mxu0
    %v324 = vadd.f32 %v125, %v323
    %v325 = vpop.f32.mrb[0].mxu0
    %326 = vmatprep.mubr.f32.mxu0 0.0
    %327 = vmatmul.mubr.f32.gmra.mrb[0].mxu0 %v183
    %v328 = vpop.f32.mrb[0].mxu0
    %v329 = vadd.f32 %v130, %v328
    %v330 = vpop.f32.mrb[0].mxu0
    %331 = vmatprep.mubr.f32.mxu0 0.0
    %332 = vmatmul.mubr.f32.gmra.mrb[0].mxu0 %v186
    %v333 = vpop.f32.mrb[0].mxu0
    %v334 = vadd.f32 %v135, %v333
    %v335 = vpop.f32.mrb[0].mxu0
    %336 = vmatprep.mubr.f32.mxu0 0.0
    %337 = vmatmul.mubr.f32.gmra.mrb[0].mxu0 %v189
    %v338 = vpop.f32.mrb[0].mxu0
    %v339 = vadd.f32 %v140, %v338
    %v340 = vpop.f32.mrb[0].mxu0
    %341 = vdwg.mxu0
    %v342 = vmax.f32 %v264, 0.0
    %v343 = vmax.f32 %v269, 0.0
    %v344 = vmax.f32 %v274, 0.0
    %v345 = vmax.f32 %v279, 0.0
    %v346 = vmax.f32 %v284, 0.0
    %v347 = vmax.f32 %v289, 0.0
    %v348 = vmax.f32 %v294, 0.0
    %v349 = vmax.f32 %v299, 0.0
    %v350 = vmax.f32 %v304, 0.0
    %v351 = vmax.f32 %v309, 0.0
    %v352 = vmax.f32 %v314, 0.0
    %v353 = vmax.f32 %v319, 0.0
    %v354 = vmax.f32 %v324, 0.0
    %v355 = vmax.f32 %v329, 0.0
    %v356 = vmax.f32 %v334, 0.0
    %v357 = vmax.f32 %v339, 0.0
    %v358 = vld [vmem:[%s3] sm:$0xff]
    %v359 = vld [vmem:[%s3 + $0x8] sm:$0xff]
    %v360 = vld [vmem:[%s3 + $0x10] sm:$0xff]
    %v361 = vld [vmem:[%s3 + $0x18] sm:$0xff]
    %v362 = vld [vmem:[%s3 + $0x20] sm:$0xff]
    %v363 = vld [vmem:[%s3 + $0x28] sm:$0xff]
    %v364 = vld [vmem:[%s3 + $0x30] sm:$0xff]
    %v365 = vld [vmem:[%s3 + $0x38] sm:$0xff]
    %v366 = vld [vmem:[%s3 + $0x40] sm:$0xff]
    %v367 = vld [vmem:[%s3 + $0x48] sm:$0xff]
    %v368 = vld [vmem:[%s3 + $0x50] sm:$0xff]
    %v369 = vld [vmem:[%s3 + $0x58] sm:$0xff]
    %v370 = vld [vmem:[%s3 + $0x60] sm:$0xff]
    %v371 = vld [vmem:[%s3 + $0x68] sm:$0xff]
    %v372 = vld [vmem:[%s3 + $0x70] sm:$0xff]
    %v373 = vld [vmem:[%s3 + $0x78] sm:$0xff]
    %v374 = vld [vmem:[%s4] sm:$0xff]
    %v375 = vld [vmem:[%s4 + $0x8] sm:$0xff]
    %v376 = vld [vmem:[%s4 + $0x10] sm:$0xff]
    %v377 = vld [vmem:[%s4 + $0x18] sm:$0xff]
    %v378 = vld [vmem:[%s4 + $0x20] sm:$0xff]
    %v379 = vld [vmem:[%s4 + $0x28] sm:$0xff]
    %v380 = vld [vmem:[%s4 + $0x30] sm:$0xff]
    %v381 = vld [vmem:[%s4 + $0x38] sm:$0xff]
    %v382 = vld [vmem:[%s4 + $0x40] sm:$0xff]
    %v383 = vld [vmem:[%s4 + $0x48] sm:$0xff]
    %v384 = vld [vmem:[%s4 + $0x50] sm:$0xff]
    %v385 = vld [vmem:[%s4 + $0x58] sm:$0xff]
    %v386 = vld [vmem:[%s4 + $0x60] sm:$0xff]
    %v387 = vld [vmem:[%s4 + $0x68] sm:$0xff]
    %v388 = vld [vmem:[%s4 + $0x70] sm:$0xff]
    %v389 = vld [vmem:[%s4 + $0x78] sm:$0xff]
    %391 = vset.pattern.permute.xlu0 0
    %392 = vperm.xlu0 %391, %v374
    %v393 = vpop.permute.xlu0 %392
    %396 = vset.pattern.permute.xlu0 0
    %397 = vperm.xlu0 %396, %v375
    %v398 = vpop.permute.xlu0 %397
    %401 = vset.pattern.permute.xlu0 0
    %402 = vperm.xlu0 %401, %v376
    %v403 = vpop.permute.xlu0 %402
    %406 = vset.pattern.permute.xlu0 0
    %407 = vperm.xlu0 %406, %v377
    %v408 = vpop.permute.xlu0 %407
    %411 = vset.pattern.permute.xlu0 0
    %412 = vperm.xlu0 %411, %v378
    %v413 = vpop.permute.xlu0 %412
    %416 = vset.pattern.permute.xlu0 0
    %417 = vperm.xlu0 %416, %v379
    %v418 = vpop.permute.xlu0 %417
    %421 = vset.pattern.permute.xlu0 0
    %422 = vperm.xlu0 %421, %v380
    %v423 = vpop.permute.xlu0 %422
    %426 = vset.pattern.permute.xlu0 0
    %427 = vperm.xlu0 %426, %v381
    %v428 = vpop.permute.xlu0 %427
    %431 = vset.pattern.permute.xlu0 0
    %432 = vperm.xlu0 %431, %v382
    %v433 = vpop.permute.xlu0 %432
    %436 = vset.pattern.permute.xlu0 0
    %437 = vperm.xlu0 %436, %v383
    %v438 = vpop.permute.xlu0 %437
    %441 = vset.pattern.permute.xlu0 0
    %442 = vperm.xlu0 %441, %v384
    %v443 = vpop.permute.xlu0 %442
    %446 = vset.pattern.permute.xlu0 0
    %447 = vperm.xlu0 %446, %v385
    %v448 = vpop.permute.xlu0 %447
    %451 = vset.pattern.permute.xlu0 0
    %452 = vperm.xlu0 %451, %v386
    %v453 = vpop.permute.xlu0 %452
    %456 = vset.pattern.permute.xlu0 0
    %457 = vperm.xlu0 %456, %v387
    %v458 = vpop.permute.xlu0 %457
    %461 = vset.pattern.permute.xlu0 0
    %462 = vperm.xlu0 %461, %v388
    %v463 = vpop.permute.xlu0 %462
    %466 = vset.pattern.permute.xlu0 0
    %467 = vperm.xlu0 %466, %v389
    %v468 = vpop.permute.xlu0 %467
    %470 = vmatprep.subr.mxu0 0.0
    %471 = vmatpush1.msra.mxu0 %v342
    %472 = vmatprep.subr.mxu0 0.0
    %473 = vmatpush1.msra.mxu0 %v343
    %474 = vmatprep.subr.mxu0 0.0
    %475 = vmatpush1.msra.mxu0 %v344
    %476 = vmatprep.subr.mxu0 0.0
    %477 = vmatpush1.msra.mxu0 %v345
    %478 = vmatprep.subr.mxu0 0.0
    %479 = vmatpush1.msra.mxu0 %v346
    %480 = vmatprep.subr.mxu0 0.0
    %481 = vmatpush1.msra.mxu0 %v347
    %482 = vmatprep.subr.mxu0 0.0
    %483 = vmatpush1.msra.mxu0 %v348
    %484 = vmatprep.subr.mxu0 0.0
    %485 = vmatpush1.msra.mxu0 %v349
    %486 = vmatprep.subr.mxu0 0.0
    %487 = vmatpush1.msra.mxu0 %v350
    %488 = vmatprep.subr.mxu0 0.0
    %489 = vmatpush1.msra.mxu0 %v351
    %490 = vmatprep.subr.mxu0 0.0
    %491 = vmatpush1.msra.mxu0 %v352
    %492 = vmatprep.subr.mxu0 0.0
    %493 = vmatpush1.msra.mxu0 %v353
    %494 = vmatprep.subr.mxu0 0.0
    %495 = vmatpush1.msra.mxu0 %v354
    %496 = vmatprep.subr.mxu0 0.0
    %497 = vmatpush1.msra.mxu0 %v355
    %498 = vmatprep.subr.mxu0 0.0
    %499 = vmatpush1.msra.mxu0 %v356
    %500 = vmatprep.subr.mxu0 0.0
    %501 = vmatpush1.msra.mxu0 %v357
    %502 = vmatprep.subr.mxu0 0.0
    %503 = vmatpush1.msra.mxu0 0.0
    %504 = vmatprep.subr.mxu0 0.0
    %505 = vmatpush1.msra.mxu0 0.0
    %506 = vmatprep.subr.mxu0 0.0
    %507 = vmatpush1.msra.mxu0 0.0
    %508 = vmatprep.subr.mxu0 0.0
    %509 = vmatpush1.msra.mxu0 0.0
    %510 = vmatprep.subr.mxu0 0.0
    %511 = vmatpush1.msra.mxu0 0.0
    %512 = vmatprep.subr.mxu0 0.0
    %513 = vmatpush1.msra.mxu0 0.0
    %514 = vmatprep.subr.mxu0 0.0
    %515 = vmatpush1.msra.mxu0 0.0
    %516 = vmatprep.subr.mxu0 0.0
    %517 = vmatpush1.msra.mxu0 0.0
    %518 = vmatprep.subr.mxu0 0.0
    %519 = vmatpush1.msra.mxu0 0.0
    %520 = vmatprep.subr.mxu0 0.0
    %521 = vmatpush1.msra.mxu0 0.0
    %522 = vmatprep.subr.mxu0 0.0
    %523 = vmatpush1.msra.mxu0 0.0
    %524 = vmatprep.subr.mxu0 0.0
    %525 = vmatpush1.msra.mxu0 0.0
    %526 = vmatprep.subr.mxu0 0.0
    %527 = vmatpush1.msra.mxu0 0.0
    %528 = vmatprep.subr.mxu0 0.0
    %529 = vmatpush1.msra.mxu0 0.0
    %530 = vmatprep.subr.mxu0 0.0
    %531 = vmatpush1.msra.mxu0 0.0
    %532 = vmatprep.subr.mxu0 0.0
    %533 = vmatpush1.msra.mxu0 0.0
    %534 = vmatprep.mubr.f32.mxu0 0.0
    %535 = vmatmul.mubr.f32.gmra.mrb[0].mxu0 %v358
    %v536 = vpop.f32.mrb[0].mxu0
    %v537 = vadd.f32 %v393, %v536
    %v538 = vpop.f32.mrb[0].mxu0
    %539 = vmatprep.mubr.f32.mxu0 0.0
    %540 = vmatmul.mubr.f32.gmra.mrb[0].mxu0 %v359
    %v541 = vpop.f32.mrb[0].mxu0
    %v542 = vadd.f32 %v398, %v541
    %v543 = vpop.f32.mrb[0].mxu0
    %544 = vmatprep.mubr.f32.mxu0 0.0
    %545 = vmatmul.mubr.f32.gmra.mrb[0].mxu0 %v360
    %v546 = vpop.f32.mrb[0].mxu0
    %v547 = vadd.f32 %v403, %v546
    %v548 = vpop.f32.mrb[0].mxu0
    %549 = vmatprep.mubr.f32.mxu0 0.0
    %550 = vmatmul.mubr.f32.gmra.mrb[0].mxu0 %v361
    %v551 = vpop.f32.mrb[0].mxu0
    %v552 = vadd.f32 %v408, %v551
    %v553 = vpop.f32.mrb[0].mxu0
    %554 = vmatprep.mubr.f32.mxu0 0.0
    %555 = vmatmul.mubr.f32.gmra.mrb[0].mxu0 %v362
    %v556 = vpop.f32.mrb[0].mxu0
    %v557 = vadd.f32 %v413, %v556
    %v558 = vpop.f32.mrb[0].mxu0
    %559 = vmatprep.mubr.f32.mxu0 0.0
    %560 = vmatmul.mubr.f32.gmra.mrb[0].mxu0 %v363
    %v561 = vpop.f32.mrb[0].mxu0
    %v562 = vadd.f32 %v418, %v561
    %v563 = vpop.f32.mrb[0].mxu0
    %564 = vmatprep.mubr.f32.mxu0 0.0
    %565 = vmatmul.mubr.f32.gmra.mrb[0].mxu0 %v364
    %v566 = vpop.f32.mrb[0].mxu0
    %v567 = vadd.f32 %v423, %v566
    %v568 = vpop.f32.mrb[0].mxu0
    %569 = vmatprep.mubr.f32.mxu0 0.0
    %570 = vmatmul.mubr.f32.gmra.mrb[0].mxu0 %v365
    %v571 = vpop.f32.mrb[0].mxu0
    %v572 = vadd.f32 %v428, %v571
    %v573 = vpop.f32.mrb[0].mxu0
    %574 = vmatprep.mubr.f32.mxu0 0.0
    %575 = vmatmul.mubr.f32.gmra.mrb[0].mxu0 %v366
    %v576 = vpop.f32.mrb[0].mxu0
    %v577 = vadd.f32 %v433, %v576
    %v578 = vpop.f32.mrb[0].mxu0
    %579 = vmatprep.mubr.f32.mxu0 0.0
    %580 = vmatmul.mubr.f32.gmra.mrb[0].mxu0 %v367
    %v581 = vpop.f32.mrb[0].mxu0
    %v582 = vadd.f32 %v438, %v581
    %v583 = vpop.f32.mrb[0].mxu0
    %584 = vmatprep.mubr.f32.mxu0 0.0
    %585 = vmatmul.mubr.f32.gmra.mrb[0].mxu0 %v368
    %v586 = vpop.f32.mrb[0].mxu0
    %v587 = vadd.f32 %v443, %v586
    %v588 = vpop.f32.mrb[0].mxu0
    %589 = vmatprep.mubr.f32.mxu0 0.0
    %590 = vmatmul.mubr.f32.gmra.mrb[0].mxu0 %v369
    %v591 = vpop.f32.mrb[0].mxu0
    %v592 = vadd.f32 %v448, %v591
    %v593 = vpop.f32.mrb[0].mxu0
    %594 = vmatprep.mubr.f32.mxu0 0.0
    %595 = vmatmul.mubr.f32.gmra.mrb[0].mxu0 %v370
    %v596 = vpop.f32.mrb[0].mxu0
    %v597 = vadd.f32 %v453, %v596
    %v598 = vpop.f32.mrb[0].mxu0
    %599 = vmatprep.mubr.f32.mxu0 0.0
    %600 = vmatmul.mubr.f32.gmra.mrb[0].mxu0 %v371
    %v601 = vpop.f32.mrb[0].mxu0
    %v602 = vadd.f32 %v458, %v601
    %v603 = vpop.f32.mrb[0].mxu0
    %604 = vmatprep.mubr.f32.mxu0 0.0
    %605 = vmatmul.mubr.f32.gmra.mrb[0].mxu0 %v372
    %v606 = vpop.f32.mrb[0].mxu0
    %v607 = vadd.f32 %v463, %v606
    %v608 = vpop.f32.mrb[0].mxu0
    %609 = vmatprep.mubr.f32.mxu0 0.0
    %610 = vmatmul.mubr.f32.gmra.mrb[0].mxu0 %v373
    %v611 = vpop.f32.mrb[0].mxu0
    %v612 = vadd.f32 %v468, %v611
    %v613 = vpop.f32.mrb[0].mxu0
    %614 = vdwg.mxu0
    %v615 = vmax.f32 %v537, 0.0
    %v616 = vmax.f32 %v542, 0.0
    %v617 = vmax.f32 %v547, 0.0
    %v618 = vmax.f32 %v552, 0.0
    %v619 = vmax.f32 %v557, 0.0
    %v620 = vmax.f32 %v562, 0.0
    %v621 = vmax.f32 %v567, 0.0
    %v622 = vmax.f32 %v572, 0.0
    %v623 = vmax.f32 %v577, 0.0
    %v624 = vmax.f32 %v582, 0.0
    %v625 = vmax.f32 %v587, 0.0
    %v626 = vmax.f32 %v592, 0.0
    %v627 = vmax.f32 %v597, 0.0
    %v628 = vmax.f32 %v602, 0.0
    %v629 = vmax.f32 %v607, 0.0
    %v630 = vmax.f32 %v612, 0.0
    %v631 = vld [vmem:[%s5] sm:$0xff]
    %v632 = vld [vmem:[%s5 + $0x8] sm:$0xff]
    %v633 = vld [vmem:[%s5 + $0x10] sm:$0xff]
    %v634 = vld [vmem:[%s5 + $0x18] sm:$0xff]
    %v635 = vld [vmem:[%s5 + $0x20] sm:$0xff]
    %v636 = vld [vmem:[%s5 + $0x28] sm:$0xff]
    %v637 = vld [vmem:[%s5 + $0x30] sm:$0xff]
    %v638 = vld [vmem:[%s5 + $0x38] sm:$0xff]
    %v639 = vld [vmem:[%s5 + $0x40] sm:$0xff]
    %v640 = vld [vmem:[%s5 + $0x48] sm:$0xff]
    %v641 = vld [vmem:[%s5 + $0x50] sm:$0xff]
    %v642 = vld [vmem:[%s5 + $0x58] sm:$0xff]
    %v643 = vld [vmem:[%s5 + $0x60] sm:$0xff]
    %v644 = vld [vmem:[%s5 + $0x68] sm:$0xff]
    %v645 = vld [vmem:[%s5 + $0x70] sm:$0xff]
    %v646 = vld [vmem:[%s5 + $0x78] sm:$0xff]
    %648 = vset.pattern.permute.xlu0 0
    %649 = vperm.xlu0 %648, %v631
    %v650 = vpop.permute.xlu0 %649
    %653 = vset.pattern.permute.xlu0 0
    %654 = vperm.xlu0 %653, %v632
    %v655 = vpop.permute.xlu0 %654
    %658 = vset.pattern.permute.xlu0 0
    %659 = vperm.xlu0 %658, %v633
    %v660 = vpop.permute.xlu0 %659
    %663 = vset.pattern.permute.xlu0 0
    %664 = vperm.xlu0 %663, %v634
    %v665 = vpop.permute.xlu0 %664
    %668 = vset.pattern.permute.xlu0 0
    %669 = vperm.xlu0 %668, %v635
    %v670 = vpop.permute.xlu0 %669
    %673 = vset.pattern.permute.xlu0 0
    %674 = vperm.xlu0 %673, %v636
    %v675 = vpop.permute.xlu0 %674
    %678 = vset.pattern.permute.xlu0 0
    %679 = vperm.xlu0 %678, %v637
    %v680 = vpop.permute.xlu0 %679
    %683 = vset.pattern.permute.xlu0 0
    %684 = vperm.xlu0 %683, %v638
    %v685 = vpop.permute.xlu0 %684
    %688 = vset.pattern.permute.xlu0 0
    %689 = vperm.xlu0 %688, %v639
    %v690 = vpop.permute.xlu0 %689
    %693 = vset.pattern.permute.xlu0 0
    %694 = vperm.xlu0 %693, %v640
    %v695 = vpop.permute.xlu0 %694
    %698 = vset.pattern.permute.xlu0 0
    %699 = vperm.xlu0 %698, %v641
    %v700 = vpop.permute.xlu0 %699
    %703 = vset.pattern.permute.xlu0 0
    %704 = vperm.xlu0 %703, %v642
    %v705 = vpop.permute.xlu0 %704
    %708 = vset.pattern.permute.xlu0 0
    %709 = vperm.xlu0 %708, %v643
    %v710 = vpop.permute.xlu0 %709
    %713 = vset.pattern.permute.xlu0 0
    %714 = vperm.xlu0 %713, %v644
    %v715 = vpop.permute.xlu0 %714
    %718 = vset.pattern.permute.xlu0 0
    %719 = vperm.xlu0 %718, %v645
    %v720 = vpop.permute.xlu0 %719
    %723 = vset.pattern.permute.xlu0 0
    %724 = vperm.xlu0 %723, %v646
    %v725 = vpop.permute.xlu0 %724
    %v727 = vmul.f32 %v615, %v650
    %v728 = vmul.f32 %v616, %v655
    %v729 = vmul.f32 %v617, %v660
    %v730 = vmul.f32 %v618, %v665
    %v731 = vmul.f32 %v619, %v670
    %v732 = vmul.f32 %v620, %v675
    %v733 = vmul.f32 %v621, %v680
    %v734 = vmul.f32 %v622, %v685
    %v735 = vmul.f32 %v623, %v690
    %v736 = vmul.f32 %v624, %v695
    %v737 = vmul.f32 %v625, %v700
    %v738 = vmul.f32 %v626, %v705
    %v739 = vmul.f32 %v627, %v710
    %v740 = vmul.f32 %v628, %v715
    %v741 = vmul.f32 %v629, %v720
    %v742 = vmul.f32 %v630, %v725
    %vm743 = vcmask 130048
    %v744 = vsel %vm743, %v727, 0.0
    %v745 = vsel %vm743, %v728, 0.0
    %v746 = vadd.f32 %v744, %v745
    %v747 = vsel %vm743, %v729, 0.0
    %v748 = vadd.f32 %v746, %v747
    %v749 = vsel %vm743, %v730, 0.0
    %v750 = vadd.f32 %v748, %v749
    %v751 = vsel %vm743, %v731, 0.0
    %v752 = vadd.f32 %v750, %v751
    %v753 = vsel %vm743, %v732, 0.0
    %v754 = vadd.f32 %v752, %v753
    %v755 = vsel %vm743, %v733, 0.0
    %v756 = vadd.f32 %v754, %v755
    %v757 = vsel %vm743, %v734, 0.0
    %v758 = vadd.f32 %v756, %v757
    %v759 = vsel %vm743, %v735, 0.0
    %v760 = vadd.f32 %v758, %v759
    %v761 = vsel %vm743, %v736, 0.0
    %v762 = vadd.f32 %v760, %v761
    %v763 = vsel %vm743, %v737, 0.0
    %v764 = vadd.f32 %v762, %v763
    %v765 = vsel %vm743, %v738, 0.0
    %v766 = vadd.f32 %v764, %v765
    %v767 = vsel %vm743, %v739, 0.0
    %v768 = vadd.f32 %v766, %v767
    %v769 = vsel %vm743, %v740, 0.0
    %v770 = vadd.f32 %v768, %v769
    %v771 = vsel %vm743, %v741, 0.0
    %v772 = vadd.f32 %v770, %v771
    %v773 = vsel %vm743, %v742, 0.0
    %v774 = vadd.f32 %v772, %v773
    %v775 = vrot.slane %v774, 4
    %v776 = vadd.f32 %v774, %v775
    %v777 = vrot.slane %v776, 2
    %v778 = vadd.f32 %v776, %v777
    %v779 = vrot.slane %v778, 1
    %v780 = vadd.f32 %v778, %v779
    %s781 = sld [smem:[#allocation2]]
    %v782 = vstv %s781
    %v783 = vadd.f32 %v780, %v782
    %vm784 = vcmask 122880
    %785 = vst.msk [vmem:[#allocation3] sm:$0x1] %vm784, %v783
    // Predicated region
    $region30: #{tpu_custom_call.1} parent=1 // pred_check
      _
    $region31: #{tpu_custom_call.1} parent=1 // pred_check_branch
      %787 = sbr.rel (0) target = $region33
    $region32: #{tpu_custom_call.1} parent=1 // pred_region
      %s789 = ssub.s32 16, 16
      %790 = vsyncadd [#allocation4], %s789
      %s792 = sshll.u32 [#allocation3], 4
      %s793 = int_to_ptr.vmem [resolvable:$true] %s792
      %795 = dma.vmem_to_hbm [thread:$0]  %s793, 16, %s7, [#allocation4]
    $region33: #{tpu_custom_call.1} parent=1 // pred_fallthru
      _
    // Predicated region
    $region34: #{tpu_custom_call.1} parent=1 // pred_check
      _
    $region35: #{tpu_custom_call.1} parent=1 // pred_check_branch
      %797 = sbr.rel (0) target = $region37
    $region36: #{tpu_custom_call.1} parent=1 // pred_region
      %798 = dma.done [#allocation4], 16
    $region37: #{tpu_custom_call.1} parent=1 // pred_fallthru
      _
    %799 = vsyncpa [#allocation4], 1

</llo_original>
